<compile_context>
chip_gen: v6e
topology: v6e:2x2x1
jax: 0.10.0
libtpu: 0.0.40
codegen_flags: <defaults>
</compile_context>

<pallas_src>
import functools

import jax
import jax.numpy as jnp
from jax.experimental import pallas as pl
from jax.experimental.pallas import tpu as pltpu

_OUT_PAD = 128  # lane-dense output width (multiple of 128 lanes -> unmasked stores)


def _mlp_kernel(x_ref, w1_ref, b1_ref, w2_ref, b2_ref, w3_ref, b3_ref, o_ref):
    # fc1: bf16 x / W1 on the MXU, f32 accumulation; bias + ReLU on the VPU in f32.
    h1 = jnp.dot(x_ref[...], w1_ref[...], preferred_element_type=jnp.float32)
    h1 = jnp.maximum(h1 + b1_ref[...], 0.0)

    # fc2: cast the activation to bf16 so the MXU runs at full bf16 rate.
    h2 = jnp.dot(h1.astype(jnp.bfloat16), w2_ref[...],
                 preferred_element_type=jnp.float32)
    h2 = jnp.maximum(h2 + b2_ref[...], 0.0)

    # fc3 (output_dim == 1): VPU broadcast-multiply + XLU lane reduction; an N=1 MXU
    # matmul would light up a single column of the systolic array.
    z = jnp.sum(h2 * w3_ref[...], axis=-1, keepdims=True) + b3_ref[...]   # (block_b, 1)

    # Sigmoid: exp and approx reciprocal both go to the EUP slot (VALU stays free).
    s = pl.reciprocal(1.0 + jnp.exp(-z), approx=True)

    # Lane-dense writeback: broadcast the single output column across 128 lanes so the
    # store is a full-width vst; the wrapper slices column 0 back out.
    o_ref[...] = jnp.broadcast_to(s, o_ref.shape).astype(o_ref.dtype)


@functools.partial(jax.jit, static_argnames=("block_b",))
def mlp_forward(x, w1, b1, w2, b2, w3, b3, *, block_b=256):
    B, in_dim = x.shape
    h1_dim = w1.shape[1]
    h2_dim = w2.shape[1]
    out_dim = w3.shape[1]
    assert out_dim == 1, "kernel specialises fc3 to the module's output_dim=1"
    block_b = min(block_b, B)
    assert B % block_b == 0 and block_b % 8 == 0

    # bf16 MXU operands (cast once here, outside the kernel); biases stay f32.
    x_bf = x.astype(jnp.bfloat16)
    w1_bf = w1.astype(jnp.bfloat16)
    w2_bf = w2.astype(jnp.bfloat16)
    b1_r = b1.reshape(1, h1_dim).astype(jnp.float32)
    b2_r = b2.reshape(1, h2_dim).astype(jnp.float32)
    w3_r = w3.astype(jnp.float32).T            # (1, h2_dim) row for the VPU reduce
    b3_r = b3.reshape(1, 1).astype(jnp.float32)

    grid = (B // block_b,)
    flops = 2 * B * (in_dim * h1_dim + h1_dim * h2_dim + h2_dim * out_dim)
    bytes_accessed = (
        x_bf.size * 2 + w1_bf.size * 2 + w2_bf.size * 2
        + (b1_r.size + b2_r.size + w3_r.size + b3_r.size) * 4
        + B * _OUT_PAD * 4
    )

    out_padded = pl.pallas_call(
        _mlp_kernel,
        out_shape=jax.ShapeDtypeStruct((B, _OUT_PAD), x.dtype),
        grid_spec=pltpu.PrefetchScalarGridSpec(
            num_scalar_prefetch=0,
            grid=grid,
            in_specs=[
                pl.BlockSpec((block_b, in_dim), lambda i: (i, 0)),   # x tile over batch
                pl.BlockSpec((in_dim, h1_dim), lambda i: (0, 0)),    # W1 (resident)
                pl.BlockSpec((1, h1_dim), lambda i: (0, 0)),         # b1
                pl.BlockSpec((h1_dim, h2_dim), lambda i: (0, 0)),    # W2 (resident)
                pl.BlockSpec((1, h2_dim), lambda i: (0, 0)),         # b2
                pl.BlockSpec((1, h2_dim), lambda i: (0, 0)),         # w3 as a row
                pl.BlockSpec((1, 1), lambda i: (0, 0)),              # b3
            ],
            out_specs=pl.BlockSpec((block_b, _OUT_PAD), lambda i: (i, 0)),
        ),
        compiler_params=pltpu.CompilerParams(
            dimension_semantics=("parallel",),
        ),
        cost_estimate=pl.CostEstimate(
            flops=flops, transcendentals=2 * B, bytes_accessed=bytes_accessed),
    )(x_bf, w1_bf, b1_r, w2_bf, b2_r, w3_r, b3_r)

    return out_padded[:, :out_dim]


def _init_linear(key, in_dim, out_dim):
    # Deterministic synthetic init (uniform, like torch's default scale 1/sqrt(in_dim)).
    kw, kb = jax.random.split(key)
    bound = 1.0 / jnp.sqrt(in_dim)
    w = jax.random.uniform(kw, (in_dim, out_dim), jnp.float32, -bound, bound)
    b = jax.random.uniform(kb, (out_dim,), jnp.float32, -bound, bound)
    return w, b


if __name__ == "__main__":
    key = jax.random.PRNGKey(0)
    k_x, k1, k2, k3 = jax.random.split(key, 4)

    # MLP(input_dim=32, hidden_dim1=64, hidden_dim2=32, output_dim=1).
    # Batch sized so the kernel runs 256-row tiles over 4 grid steps (feeds both
    # TensorCores on v7x, amortises per-step overhead on v5e/v6e).
    B, input_dim, hidden1, hidden2, output_dim = 1024, 32, 64, 32, 1

    x = jax.random.normal(k_x, (B, input_dim), jnp.float32)
    w1, b1 = _init_linear(k1, input_dim, hidden1)
    w2, b2 = _init_linear(k2, hidden1, hidden2)
    w3, b3 = _init_linear(k3, hidden2, output_dim)

    out = mlp_forward(x, w1, b1, w2, b2, w3, b3, block_b=256)
    out = jax.block_until_ready(out)

    # Pure-JAX f32 reference. The kernel uses bf16 MXU operands (f32 accumulation),
    # so use a bf16-appropriate tolerance.
    h1 = jnp.maximum(x @ w1 + b1, 0.0)
    h2 = jnp.maximum(h1 @ w2 + b2, 0.0)
    ref = jax.nn.sigmoid(h2 @ w3 + b3)
    assert out.shape == (B, output_dim)
    assert jnp.allclose(out, ref, atol=2e-2, rtol=2e-2), float(jnp.max(jnp.abs(out - ref)))

    print("KERNEL_OK")
</pallas_src>

<mosaic_0001>
module attributes {stable_mosaic.version = 11 : i64} {
  func.func @_mlp_kernel(%arg0: i32, %arg1: memref<256x32xbf16, #tpu.memory_space<vmem>>, %arg2: memref<32x64xbf16, #tpu.memory_space<vmem>>, %arg3: memref<1x64xf32, #tpu.memory_space<vmem>>, %arg4: memref<64x32xbf16, #tpu.memory_space<vmem>>, %arg5: memref<1x32xf32, #tpu.memory_space<vmem>>, %arg6: memref<1x32xf32, #tpu.memory_space<vmem>>, %arg7: memref<1x1xf32, #tpu.memory_space<vmem>>, %arg8: memref<256x128xf32, #tpu.memory_space<vmem>>) attributes {dimension_semantics = [#tpu.dimension_semantics<parallel>], iteration_bounds = array<i64: 4>, scalar_prefetch = 0 : i64, scratch_operands = 0 : i64, tpu.core_type = #tpu.core_type<tc>, window_params = [{transform_indices = @transform_0, window_bounds = array<i64: 256, 32>}, {pipeline_mode = #tpu.pipeline_mode<synchronous>, transform_indices = @transform_1, window_bounds = array<i64: 32, 64>}, {pipeline_mode = #tpu.pipeline_mode<synchronous>, transform_indices = @transform_2, window_bounds = array<i64: 1, 64>}, {pipeline_mode = #tpu.pipeline_mode<synchronous>, transform_indices = @transform_3, window_bounds = array<i64: 64, 32>}, {pipeline_mode = #tpu.pipeline_mode<synchronous>, transform_indices = @transform_4, window_bounds = array<i64: 1, 32>}, {pipeline_mode = #tpu.pipeline_mode<synchronous>, transform_indices = @transform_5, window_bounds = array<i64: 1, 32>}, {pipeline_mode = #tpu.pipeline_mode<synchronous>, transform_indices = @transform_6, window_bounds = array<i64: 1, 1>}, {transform_indices = @transform_7, window_bounds = array<i64: 256, 128>}]} {
    %c0 = arith.constant 0 : index
    %c0_0 = arith.constant 0 : index
    %0 = vector.load %arg1[%c0, %c0_0] : memref<256x32xbf16, #tpu.memory_space<vmem>>, vector<256x32xbf16>
    %c0_1 = arith.constant 0 : index
    %c0_2 = arith.constant 0 : index
    %1 = vector.load %arg2[%c0_1, %c0_2] : memref<32x64xbf16, #tpu.memory_space<vmem>>, vector<32x64xbf16>
    %cst = arith.constant dense<0.000000e+00> : vector<256x64xf32>
    %2 = tpu.matmul %0, %1, %cst {dimension_numbers = #tpu.dot_dimension_numbers<[1], [0], [0], [1], [0, 0, 1, 1], [], []>} : vector<256x32xbf16>, vector<32x64xbf16>, vector<256x64xf32> -> vector<256x64xf32>
    %c0_3 = arith.constant 0 : index
    %c0_4 = arith.constant 0 : index
    %3 = vector.load %arg3[%c0_3, %c0_4] : memref<1x64xf32, #tpu.memory_space<vmem>>, vector<1x64xf32>
    %4 = vector.broadcast %3 : vector<1x64xf32> to vector<256x64xf32>
    %5 = arith.addf %2, %4 : vector<256x64xf32>
    %cst_5 = arith.constant 0.000000e+00 : f32
    %6 = vector.broadcast %cst_5 : f32 to vector<256x64xf32>
    %7 = arith.maximumf %5, %6 : vector<256x64xf32>
    %8 = arith.truncf %7 : vector<256x64xf32> to vector<256x64xbf16>
    %c0_6 = arith.constant 0 : index
    %c0_7 = arith.constant 0 : index
    %9 = vector.load %arg4[%c0_6, %c0_7] : memref<64x32xbf16, #tpu.memory_space<vmem>>, vector<64x32xbf16>
    %cst_8 = arith.constant dense<0.000000e+00> : vector<256x32xf32>
    %10 = tpu.matmul %8, %9, %cst_8 {dimension_numbers = #tpu.dot_dimension_numbers<[1], [0], [0], [1], [0, 0, 1, 1], [], []>} : vector<256x64xbf16>, vector<64x32xbf16>, vector<256x32xf32> -> vector<256x32xf32>
    %c0_9 = arith.constant 0 : index
    %c0_10 = arith.constant 0 : index
    %11 = vector.load %arg5[%c0_9, %c0_10] : memref<1x32xf32, #tpu.memory_space<vmem>>, vector<1x32xf32>
    %12 = vector.broadcast %11 : vector<1x32xf32> to vector<256x32xf32>
    %13 = arith.addf %10, %12 : vector<256x32xf32>
    %cst_11 = arith.constant 0.000000e+00 : f32
    %14 = vector.broadcast %cst_11 : f32 to vector<256x32xf32>
    %15 = arith.maximumf %13, %14 : vector<256x32xf32>
    %c0_12 = arith.constant 0 : index
    %c0_13 = arith.constant 0 : index
    %16 = vector.load %arg6[%c0_12, %c0_13] : memref<1x32xf32, #tpu.memory_space<vmem>>, vector<1x32xf32>
    %17 = vector.broadcast %16 : vector<1x32xf32> to vector<256x32xf32>
    %18 = arith.mulf %15, %17 : vector<256x32xf32>
    %cst_14 = arith.constant dense<0.000000e+00> : vector<256xf32>
    %19 = vector.multi_reduction <add>, %18, %cst_14 [1] : vector<256x32xf32> to vector<256xf32>
    %20 = vector.shape_cast %19 : vector<256xf32> to vector<256x1xf32>
    %c0_15 = arith.constant 0 : index
    %c0_16 = arith.constant 0 : index
    %21 = vector.load %arg7[%c0_15, %c0_16] : memref<1x1xf32, #tpu.memory_space<vmem>>, vector<1x1xf32>
    %22 = vector.broadcast %21 : vector<1x1xf32> to vector<256x1xf32>
    %23 = arith.addf %20, %22 : vector<256x1xf32>
    %cst_17 = arith.constant 0.000000e+00 : f32
    %24 = vector.broadcast %cst_17 : f32 to vector<256x1xf32>
    %25 = arith.subf %24, %23 : vector<256x1xf32>
    %26 = math.exp %25 : vector<256x1xf32>
    %cst_18 = arith.constant 1.000000e+00 : f32
    %27 = vector.broadcast %cst_18 : f32 to vector<256x1xf32>
    %28 = arith.addf %27, %26 : vector<256x1xf32>
    %29 = tpu.reciprocal %28 {approx = true} : vector<256x1xf32> -> vector<256x1xf32>
    %30 = vector.shape_cast %29 : vector<256x1xf32> to vector<256x1xf32>
    %31 = vector.broadcast %30 : vector<256x1xf32> to vector<256x128xf32>
    %c0_19 = arith.constant 0 : index
    %c0_20 = arith.constant 0 : index
    %32 = vector.load %arg8[%c0_19, %c0_20] : memref<256x128xf32, #tpu.memory_space<vmem>>, vector<256x128xf32>
    tpu.vector_store %arg8[%c0_19, %c0_20], %31 {strides = array<i32>} : memref<256x128xf32, #tpu.memory_space<vmem>>, vector<256x128xf32>,
    return
  }
  func.func @transform_0(%arg0: i32) -> (i32, i32) {
    %c0_i32 = arith.constant 0 : i32
    %c0_i32_0 = arith.constant 0 : i32
    return %arg0, %c0_i32 : i32, i32
  }
  func.func @transform_1(%arg0: i32) -> (i32, i32) {
    %c0_i32 = arith.constant 0 : i32
    %c0_i32_0 = arith.constant 0 : i32
    %c0_i32_1 = arith.constant 0 : i32
    return %c0_i32, %c0_i32_0 : i32, i32
  }
  func.func @transform_2(%arg0: i32) -> (i32, i32) {
    %c0_i32 = arith.constant 0 : i32
    %c0_i32_0 = arith.constant 0 : i32
    %c0_i32_1 = arith.constant 0 : i32
    return %c0_i32, %c0_i32_0 : i32, i32
  }
  func.func @transform_3(%arg0: i32) -> (i32, i32) {
    %c0_i32 = arith.constant 0 : i32
    %c0_i32_0 = arith.constant 0 : i32
    %c0_i32_1 = arith.constant 0 : i32
    return %c0_i32, %c0_i32_0 : i32, i32
  }
  func.func @transform_4(%arg0: i32) -> (i32, i32) {
    %c0_i32 = arith.constant 0 : i32
    %c0_i32_0 = arith.constant 0 : i32
    %c0_i32_1 = arith.constant 0 : i32
    return %c0_i32, %c0_i32_0 : i32, i32
  }
  func.func @transform_5(%arg0: i32) -> (i32, i32) {
    %c0_i32 = arith.constant 0 : i32
    %c0_i32_0 = arith.constant 0 : i32
    %c0_i32_1 = arith.constant 0 : i32
    return %c0_i32, %c0_i32_0 : i32, i32
  }
  func.func @transform_6(%arg0: i32) -> (i32, i32) {
    %c0_i32 = arith.constant 0 : i32
    %c0_i32_0 = arith.constant 0 : i32
    %c0_i32_1 = arith.constant 0 : i32
    return %c0_i32, %c0_i32_0 : i32, i32
  }
  func.func @transform_7(%arg0: i32) -> (i32, i32) {
    %c0_i32 = arith.constant 0 : i32
    %c0_i32_0 = arith.constant 0 : i32
    return %arg0, %c0_i32 : i32, i32
  }
}

</mosaic_0001>

<llo_original>
// kernel: mlp_forward.1
$region0: #{mlp_forward.1}
  #allocation0 [shape = 'u32[]', space=smem, size = 0x4, offset = 0x4, fixed_abs, tag = 'smem constant byte address 0x4 - core index']
  #allocation1 [shape = 'u32[144,128]{1,0:T(1,128)}', space=vmem, size = 0x12000, scoped, tag = 'internal scratch']
  #allocation2 [shape = 'f32[1,1]{1,0:T(1,128)S(1)}', space=vmem, size = 0x200, scoped, tag = 'scoped memory for mlp_forward.1']
  %s0 = inlined_call_operand.vmem [shape: bf16[1024,32], index: 0, kind: input, shape index: {}]
  %s1 = inlined_call_operand.vmem [shape: bf16[32,64], index: 1, kind: input, shape index: {}]
  %s2 = inlined_call_operand.vmem [shape: f32[1,64], index: 2, kind: input, shape index: {}]
  %s3 = inlined_call_operand.vmem [shape: bf16[64,32], index: 3, kind: input, shape index: {}]
  %s4 = inlined_call_operand.vmem [shape: f32[1,32], index: 4, kind: input, shape index: {}]
  %s5 = inlined_call_operand.vmem [shape: f32[1,32], index: 5, kind: input, shape index: {}]
  %s6 = inlined_call_operand.<no memory space> [shape: f32[1,1], index: 6, kind: input, shape index: {}]
  %s7 = inlined_call_operand.vmem [shape: f32[1024,128], index: 7, kind: output, shape index: {}]
  %s8 = sld [smem:[#allocation0]]
  $region61: #{mlp_forward.1} parent=0
    _
  %s10 = ssub.s32 1, %s8
  %s11 = scalar_select 0, %s10, %s8
  %v12 = vstv %s6
  %13 = vst [vmem:[#allocation2] sm:$0x1] %v12
  loop: start=0, step=1, limit=6
  $region2: #{mlp_forward.1} parent=0 // loop_pre_header
    _
  $region3: #{mlp_forward.1} parent=0 // loop_header
    %s15 = sphi 0, %s19
    %p16 = scmp.ge.s32.totalorder %s15, 6
    %s25 = sphi 0, %s27
    %s28 = sphi 0, %s25
    %s29 = sphi 0, %s28
    %s45 = sphi 0, %s29
    %s49 = sphi 0, %s49
    %s51 = sphi 0, %s49
    %s52 = sphi 0, %s51
    %s66 = sphi 0, %s52
    %s70 = sphi 0, %s70
    %s72 = sphi 0, %s70
    %s73 = sphi 0, %s72
    %s87 = sphi 0, %s73
    %s91 = sphi 0, %s91
    %s93 = sphi 0, %s91
    %s94 = sphi 0, %s93
    %s108 = sphi 0, %s94
    %s112 = sphi 0, %s112
    %s114 = sphi 0, %s112
    %s115 = sphi 0, %s114
    %s129 = sphi 0, %s115
    %s133 = sphi 0, %s133
    %s135 = sphi 0, %s133
    %s136 = sphi 0, %s135
    %s150 = sphi 0, %s136
    %s154 = sphi 0, %s154
    %s156 = sphi 0, %s154
    %s157 = sphi 0, %s156
    %s171 = sphi 0, %s157
    %s177 = sphi 0, %s179
    %s180 = sphi 0, %s177
    %s181 = sphi 0, %s180
    %s197 = sphi 0, %s181
  $region4: #{mlp_forward.1} parent=0 // loop_header_branch
    %18 = sbr.rel (%p16) target = $region8
  $region5: #{mlp_forward.1} parent=0 // loop_body
    %s20 = ssub.s32 %s15, 1
    %s21 = ssub.s32 %s15, 2
    %s22 = sadd.s32 %s15, 1
    %s23 = ssub.s32 %s15, %s22
    %p24 = scmp.eq.s32.totalorder %s23, 0
    %s26 = sadd.s32 %s25, 1
    %s27 = scalar_select %p24, %s25, %s26
    %p30 = pneg %p24
    %p31 = scmp.eq.s32.totalorder %s15, 3
    %p32 = por %p30, %p31
    %p33 = scmp.ne.s32.totalorder %s25, %s28
    %p34 = scmp.eq.s32.totalorder %s15, 0
    %p35 = por %p33, %p34
    %p36 = scmp.ne.s32.totalorder %s25, %s28
    %p37 = scmp.eq.s32.totalorder %s20, 3
    %p38 = por %p36, %p37
    %p39 = scmp.ne.s32.totalorder %s28, %s29
    %p40 = scmp.eq.s32.totalorder %s20, 0
    %p41 = por %p39, %p40
    %p42 = scmp.ne.s32.totalorder %s28, %s29
    %p43 = scmp.eq.s32.totalorder %s21, 3
    %p44 = por %p42, %p43
    %p46 = scmp.ne.s32.totalorder %s29, %s45
    %p47 = scmp.eq.s32.totalorder %s21, 0
    %p48 = por %p46, %p47
    %s50 = sadd.s32 %s49, 1
    %p53 = scmp.eq.s32.totalorder %s15, 3
    %p54 = scmp.ne.s32.totalorder %s49, %s51
    %p55 = scmp.eq.s32.totalorder %s15, 0
    %p56 = por %p54, %p55
    %p57 = scmp.ne.s32.totalorder %s49, %s51
    %p58 = scmp.eq.s32.totalorder %s20, 3
    %p59 = por %p57, %p58
    %p60 = scmp.ne.s32.totalorder %s51, %s52
    %p61 = scmp.eq.s32.totalorder %s20, 0
    %p62 = por %p60, %p61
    %p63 = scmp.ne.s32.totalorder %s51, %s52
    %p64 = scmp.eq.s32.totalorder %s21, 3
    %p65 = por %p63, %p64
    %p67 = scmp.ne.s32.totalorder %s52, %s66
    %p68 = scmp.eq.s32.totalorder %s21, 0
    %p69 = por %p67, %p68
    %s71 = sadd.s32 %s70, 1
    %p74 = scmp.eq.s32.totalorder %s15, 3
    %p75 = scmp.ne.s32.totalorder %s70, %s72
    %p76 = scmp.eq.s32.totalorder %s15, 0
    %p77 = por %p75, %p76
    %p78 = scmp.ne.s32.totalorder %s70, %s72
    %p79 = scmp.eq.s32.totalorder %s20, 3
    %p80 = por %p78, %p79
    %p81 = scmp.ne.s32.totalorder %s72, %s73
    %p82 = scmp.eq.s32.totalorder %s20, 0
    %p83 = por %p81, %p82
    %p84 = scmp.ne.s32.totalorder %s72, %s73
    %p85 = scmp.eq.s32.totalorder %s21, 3
    %p86 = por %p84, %p85
    %p88 = scmp.ne.s32.totalorder %s73, %s87
    %p89 = scmp.eq.s32.totalorder %s21, 0
    %p90 = por %p88, %p89
    %s92 = sadd.s32 %s91, 1
    %p95 = scmp.eq.s32.totalorder %s15, 3
    %p96 = scmp.ne.s32.totalorder %s91, %s93
    %p97 = scmp.eq.s32.totalorder %s15, 0
    %p98 = por %p96, %p97
    %p99 = scmp.ne.s32.totalorder %s91, %s93
    %p100 = scmp.eq.s32.totalorder %s20, 3
    %p101 = por %p99, %p100
    %p102 = scmp.ne.s32.totalorder %s93, %s94
    %p103 = scmp.eq.s32.totalorder %s20, 0
    %p104 = por %p102, %p103
    %p105 = scmp.ne.s32.totalorder %s93, %s94
    %p106 = scmp.eq.s32.totalorder %s21, 3
    %p107 = por %p105, %p106
    %p109 = scmp.ne.s32.totalorder %s94, %s108
    %p110 = scmp.eq.s32.totalorder %s21, 0
    %p111 = por %p109, %p110
    %s113 = sadd.s32 %s112, 1
    %p116 = scmp.eq.s32.totalorder %s15, 3
    %p117 = scmp.ne.s32.totalorder %s112, %s114
    %p118 = scmp.eq.s32.totalorder %s15, 0
    %p119 = por %p117, %p118
    %p120 = scmp.ne.s32.totalorder %s112, %s114
    %p121 = scmp.eq.s32.totalorder %s20, 3
    %p122 = por %p120, %p121
    %p123 = scmp.ne.s32.totalorder %s114, %s115
    %p124 = scmp.eq.s32.totalorder %s20, 0
    %p125 = por %p123, %p124
    %p126 = scmp.ne.s32.totalorder %s114, %s115
    %p127 = scmp.eq.s32.totalorder %s21, 3
    %p128 = por %p126, %p127
    %p130 = scmp.ne.s32.totalorder %s115, %s129
    %p131 = scmp.eq.s32.totalorder %s21, 0
    %p132 = por %p130, %p131
    %s134 = sadd.s32 %s133, 1
    %p137 = scmp.eq.s32.totalorder %s15, 3
    %p138 = scmp.ne.s32.totalorder %s133, %s135
    %p139 = scmp.eq.s32.totalorder %s15, 0
    %p140 = por %p138, %p139
    %p141 = scmp.ne.s32.totalorder %s133, %s135
    %p142 = scmp.eq.s32.totalorder %s20, 3
    %p143 = por %p141, %p142
    %p144 = scmp.ne.s32.totalorder %s135, %s136
    %p145 = scmp.eq.s32.totalorder %s20, 0
    %p146 = por %p144, %p145
    %p147 = scmp.ne.s32.totalorder %s135, %s136
    %p148 = scmp.eq.s32.totalorder %s21, 3
    %p149 = por %p147, %p148
    %p151 = scmp.ne.s32.totalorder %s136, %s150
    %p152 = scmp.eq.s32.totalorder %s21, 0
    %p153 = por %p151, %p152
    %s155 = sadd.s32 %s154, 1
    %p158 = scmp.eq.s32.totalorder %s15, 3
    %p159 = scmp.ne.s32.totalorder %s154, %s156
    %p160 = scmp.eq.s32.totalorder %s15, 0
    %p161 = por %p159, %p160
    %p162 = scmp.ne.s32.totalorder %s154, %s156
    %p163 = scmp.eq.s32.totalorder %s20, 3
    %p164 = por %p162, %p163
    %p165 = scmp.ne.s32.totalorder %s156, %s157
    %p166 = scmp.eq.s32.totalorder %s20, 0
    %p167 = por %p165, %p166
    %p168 = scmp.ne.s32.totalorder %s156, %s157
    %p169 = scmp.eq.s32.totalorder %s21, 3
    %p170 = por %p168, %p169
    %p172 = scmp.ne.s32.totalorder %s157, %s171
    %p173 = scmp.eq.s32.totalorder %s21, 0
    %p174 = por %p172, %p173
    %s175 = ssub.s32 %s15, %s22
    %p176 = scmp.eq.s32.totalorder %s175, 0
    %s178 = sadd.s32 %s177, 1
    %s179 = scalar_select %p176, %s177, %s178
    %p182 = pneg %p176
    %p183 = scmp.eq.s32.totalorder %s15, 3
    %p184 = por %p182, %p183
    %p185 = scmp.ne.s32.totalorder %s177, %s180
    %p186 = scmp.eq.s32.totalorder %s15, 0
    %p187 = por %p185, %p186
    %p188 = scmp.ne.s32.totalorder %s177, %s180
    %p189 = scmp.eq.s32.totalorder %s20, 3
    %p190 = por %p188, %p189
    %p191 = scmp.ne.s32.totalorder %s180, %s181
    %p192 = scmp.eq.s32.totalorder %s20, 0
    %p193 = por %p191, %p192
    %p194 = scmp.ne.s32.totalorder %s180, %s181
    %p195 = scmp.eq.s32.totalorder %s21, 3
    %p196 = por %p194, %p195
    %p198 = scmp.ne.s32.totalorder %s181, %s197
    %p199 = scmp.eq.s32.totalorder %s21, 0
    %p200 = por %p198, %p199
    %p201 = scmp.le.s32.totalorder 1, %s15
    %p202 = scmp.lt.s32.totalorder %s15, 5
    %p203 = pnand %p201, %p202
    %p204 = pneg %p203
    // Predicated region
    $region9: #{mlp_forward.1} parent=5 // pred_check
      _
    $region10: #{mlp_forward.1} parent=5 // pred_check_branch
      %206 = sbr.rel (%p203) target = $region12
    $region11: #{mlp_forward.1} parent=5 // pred_region
      %s207 = ssub.s32 %s15, 1
      // Predicated region
      $region13: #{mlp_forward.1} parent=11 // pred_check
        %p208 = pneg %p62
      $region14: #{mlp_forward.1} parent=11 // pred_check_branch
        %210 = sbr.rel (%p208) target = $region16
      $region15: #{mlp_forward.1} parent=11 // pred_region
        _
      $region16: #{mlp_forward.1} parent=11 // pred_fallthru
        _
      // Predicated region
      $region17: #{mlp_forward.1} parent=11 // pred_check
        %p211 = pneg %p83
      $region18: #{mlp_forward.1} parent=11 // pred_check_branch
        %213 = sbr.rel (%p211) target = $region20
      $region19: #{mlp_forward.1} parent=11 // pred_region
        _
      $region20: #{mlp_forward.1} parent=11 // pred_fallthru
        _
      // Predicated region
      $region21: #{mlp_forward.1} parent=11 // pred_check
        %p214 = pneg %p104
      $region22: #{mlp_forward.1} parent=11 // pred_check_branch
        %216 = sbr.rel (%p214) target = $region24
      $region23: #{mlp_forward.1} parent=11 // pred_region
        _
      $region24: #{mlp_forward.1} parent=11 // pred_fallthru
        _
      // Predicated region
      $region25: #{mlp_forward.1} parent=11 // pred_check
        %p217 = pneg %p125
      $region26: #{mlp_forward.1} parent=11 // pred_check_branch
        %219 = sbr.rel (%p217) target = $region28
      $region27: #{mlp_forward.1} parent=11 // pred_region
        _
      $region28: #{mlp_forward.1} parent=11 // pred_fallthru
        _
      // Predicated region
      $region29: #{mlp_forward.1} parent=11 // pred_check
        %p220 = pneg %p146
      $region30: #{mlp_forward.1} parent=11 // pred_check_branch
        %222 = sbr.rel (%p220) target = $region32
      $region31: #{mlp_forward.1} parent=11 // pred_region
        _
      $region32: #{mlp_forward.1} parent=11 // pred_fallthru
        _
      // Predicated region
      $region33: #{mlp_forward.1} parent=11 // pred_check
        %p223 = pneg %p167
      $region34: #{mlp_forward.1} parent=11 // pred_check_branch
        %225 = sbr.rel (%p223) target = $region36
      $region35: #{mlp_forward.1} parent=11 // pred_region
        _
      $region36: #{mlp_forward.1} parent=11 // pred_fallthru
        _
    $region12: #{mlp_forward.1} parent=5 // pred_fallthru
      _
    %p226 = scmp.lt.s32.totalorder %s15, 4
    // Predicated region
    $region37: #{mlp_forward.1} parent=5 // pred_check
      %p227 = pneg %p226
    $region38: #{mlp_forward.1} parent=5 // pred_check_branch
      %229 = sbr.rel (%p227) target = $region40
    $region39: #{mlp_forward.1} parent=5 // pred_region
      // Predicated region
      $region41: #{mlp_forward.1} parent=39 // pred_check
        %p230 = pneg %p35
      $region42: #{mlp_forward.1} parent=39 // pred_check_branch
        %232 = sbr.rel (%p230) target = $region44
      $region43: #{mlp_forward.1} parent=39 // pred_region
        %s233 = smul.u32 32, %s15
        %p234 = scmp.lt.s32.totalorder %s233, 127
        %s235 = scalar_select %p234, %s233, 127
        %s236 = smul.addr %s235, 4
        %s237 = scalar_lea.vmem %s0, %s236
        %s238 = smul.u32 32, %s15
      $region44: #{mlp_forward.1} parent=39 // pred_fallthru
        _
    $region40: #{mlp_forward.1} parent=5 // pred_fallthru
      _
    %p239 = scmp.le.s32.totalorder 1, %s15
    %p240 = scmp.lt.s32.totalorder %s15, 5
    %p241 = pnand %p239, %p240
    %p242 = pneg %p241
    // Predicated region
    $region45: #{mlp_forward.1} parent=5 // pred_check
      _
    $region46: #{mlp_forward.1} parent=5 // pred_check_branch
      %244 = sbr.rel (%p241) target = $region48
    $region47: #{mlp_forward.1} parent=5 // pred_region
      %s245 = ssub.s32 %s15, 1
      %s246 = smul.u32 32, %s20
      %p247 = scmp.lt.s32.totalorder %s246, 127
      %s248 = scalar_select %p247, %s246, 127
      %s249 = smul.addr %s248, 4
      %s250 = scalar_lea.vmem %s0, %s249
      %p251 = pneg %p41
      %p252 = pneg %p38
      %p253 = pneg %p62
      %p254 = pneg %p59
      %p255 = pneg %p83
      %p256 = pneg %p80
      %p257 = pneg %p104
      %p258 = pneg %p101
      %p259 = pneg %p125
      %p260 = pneg %p122
      %p261 = pneg %p146
      %p262 = pneg %p143
      %p263 = pneg %p167
      %p264 = pneg %p164
      %p265 = pneg %p193
      %p266 = pneg %p190
      %s267 = smul.u32 32, %s20
      %p268 = scmp.lt.s32.totalorder %s267, 127
      %s269 = scalar_select %p268, %s267, 127
      %s270 = smul.addr %s269, 8
      %s271 = scalar_lea.vmem %s7, %s270
      %s272 = smul.u32 32, %s20
      %p273 = scmp.lt.s32.totalorder %s272, 127
      %s274 = scalar_select %p273, %s272, 127
      %s275 = smul.addr %s274, 4
      %s276 = scalar_lea.vmem %s0, %s275
      %s277 = smul.u32 32, %s20
      %s278 = smul.u32 32, %s20
      %p279 = scmp.lt.s32.totalorder %s278, 127
      %s280 = scalar_select %p279, %s278, 127
      %s281 = smul.addr %s280, 8
      %s282 = scalar_lea.vmem %s7, %s281
      %s283 = smul.u32 32, %s20
      %v285 = vld [vmem:[%s276] sm:$0xf]
      %v286 = vld [vmem:[%s276 + $0x4] sm:$0xf]
      %v287 = vld [vmem:[%s276 + $0x8] sm:$0xf]
      %v288 = vld [vmem:[%s276 + $0xc] sm:$0xf]
      %v289 = vld [vmem:[%s276 + $0x10] sm:$0xf]
      %v290 = vld [vmem:[%s276 + $0x14] sm:$0xf]
      %v291 = vld [vmem:[%s276 + $0x18] sm:$0xf]
      %v292 = vld [vmem:[%s276 + $0x1c] sm:$0xf]
      %v293 = vld [vmem:[%s276 + $0x20] sm:$0xf]
      %v294 = vld [vmem:[%s276 + $0x24] sm:$0xf]
      %v295 = vld [vmem:[%s276 + $0x28] sm:$0xf]
      %v296 = vld [vmem:[%s276 + $0x2c] sm:$0xf]
      %v297 = vld [vmem:[%s276 + $0x30] sm:$0xf]
      %v298 = vld [vmem:[%s276 + $0x34] sm:$0xf]
      %v299 = vld [vmem:[%s276 + $0x38] sm:$0xf]
      %v300 = vld [vmem:[%s276 + $0x3c] sm:$0xf]
      %v301 = vld [vmem:[%s276 + $0x40] sm:$0xf]
      %v302 = vld [vmem:[%s276 + $0x44] sm:$0xf]
      %v303 = vld [vmem:[%s276 + $0x48] sm:$0xf]
      %v304 = vld [vmem:[%s276 + $0x4c] sm:$0xf]
      %v305 = vld [vmem:[%s276 + $0x50] sm:$0xf]
      %v306 = vld [vmem:[%s276 + $0x54] sm:$0xf]
      %v307 = vld [vmem:[%s276 + $0x58] sm:$0xf]
      %v308 = vld [vmem:[%s276 + $0x5c] sm:$0xf]
      %v309 = vld [vmem:[%s276 + $0x60] sm:$0xf]
      %v310 = vld [vmem:[%s276 + $0x64] sm:$0xf]
      %v311 = vld [vmem:[%s276 + $0x68] sm:$0xf]
      %v312 = vld [vmem:[%s276 + $0x6c] sm:$0xf]
      %v313 = vld [vmem:[%s276 + $0x70] sm:$0xf]
      %v314 = vld [vmem:[%s276 + $0x74] sm:$0xf]
      %v315 = vld [vmem:[%s276 + $0x78] sm:$0xf]
      %v316 = vld [vmem:[%s276 + $0x7c] sm:$0xf]
      %v317 = vld [vmem:[%s1] sm:$0xf]
      %v318 = vld [vmem:[%s1 + $0x4] sm:$0xf]
      %v319 = vld [vmem:[%s1 + $0x8] sm:$0xf]
      %v320 = vld [vmem:[%s1 + $0xc] sm:$0xf]
      %v321 = vld [vmem:[%s2] sm:$0x1]
      %v323 = vlaneseq
      %v324 = vshrl.u32 %v323, 7
      %v325 = vsub.s32 0, %v324
      %v326 = vrot.slane %v321, %v325
      %v360 = vunpack.c.l.b16 %v285
      %v361 = vunpack.c.l.b16 %v286
      %v362 = vunpack.c.l.b16 %v287
      %v363 = vunpack.c.l.b16 %v288
      %v364 = vunpack.c.l.b16 %v289
      %v365 = vunpack.c.l.b16 %v290
      %v366 = vunpack.c.l.b16 %v291
      %v367 = vunpack.c.l.b16 %v292
      %v368 = vunpack.c.l.b16 %v293
      %v369 = vunpack.c.l.b16 %v294
      %v370 = vunpack.c.l.b16 %v295
      %v371 = vunpack.c.l.b16 %v296
      %v372 = vunpack.c.l.b16 %v297
      %v373 = vunpack.c.l.b16 %v298
      %v374 = vunpack.c.l.b16 %v299
      %v375 = vunpack.c.l.b16 %v300
      %v376 = vunpack.c.l.b16 %v301
      %v377 = vunpack.c.l.b16 %v302
      %v378 = vunpack.c.l.b16 %v303
      %v379 = vunpack.c.l.b16 %v304
      %v380 = vunpack.c.l.b16 %v305
      %v381 = vunpack.c.l.b16 %v306
      %v382 = vunpack.c.l.b16 %v307
      %v383 = vunpack.c.l.b16 %v308
      %v384 = vunpack.c.l.b16 %v309
      %v385 = vunpack.c.l.b16 %v310
      %v386 = vunpack.c.l.b16 %v311
      %v387 = vunpack.c.l.b16 %v312
      %v388 = vunpack.c.l.b16 %v313
      %v389 = vunpack.c.l.b16 %v314
      %v390 = vunpack.c.l.b16 %v315
      %v391 = vunpack.c.l.b16 %v316
      %v392 = vpack.c.b16 %v361, %v360
      %v393 = vpack.c.b16 %v363, %v362
      %v394 = vpack.c.b16 %v365, %v364
      %v395 = vpack.c.b16 %v367, %v366
      %v396 = vpack.c.b16 %v369, %v368
      %v397 = vpack.c.b16 %v371, %v370
      %v398 = vpack.c.b16 %v373, %v372
      %v399 = vpack.c.b16 %v375, %v374
      %v400 = vpack.c.b16 %v377, %v376
      %v401 = vpack.c.b16 %v379, %v378
      %v402 = vpack.c.b16 %v381, %v380
      %v403 = vpack.c.b16 %v383, %v382
      %v404 = vpack.c.b16 %v385, %v384
      %v405 = vpack.c.b16 %v387, %v386
      %v406 = vpack.c.b16 %v389, %v388
      %v407 = vpack.c.b16 %v391, %v390
      %v412 = vunpack.c.l.b16 %v317
      %v413 = vunpack.c.l.b16 %v318
      %v414 = vunpack.c.l.b16 %v319
      %v415 = vunpack.c.l.b16 %v320
      %v416 = vpack.c.b16 %v413, %v412
      %v417 = vpack.c.b16 %v415, %v414
      %vm420 = vcmask 261120
      %v422 = vsel %vm420, %v392, 0
      %v425 = vsel %vm420, %v393, 0
      %v428 = vsel %vm420, %v394, 0
      %v431 = vsel %vm420, %v395, 0
      %v434 = vsel %vm420, %v396, 0
      %v437 = vsel %vm420, %v397, 0
      %v440 = vsel %vm420, %v398, 0
      %v443 = vsel %vm420, %v399, 0
      %v446 = vsel %vm420, %v400, 0
      %v449 = vsel %vm420, %v401, 0
      %v452 = vsel %vm420, %v402, 0
      %v455 = vsel %vm420, %v403, 0
      %v458 = vsel %vm420, %v404, 0
      %v461 = vsel %vm420, %v405, 0
      %v464 = vsel %vm420, %v406, 0
      %v467 = vsel %vm420, %v407, 0
      %469 = vmatprep.subr.bf16.mxu0 0
      %470 = vmatpush1.bf16.msra.mxu0 0
      %471 = vmatprep.subr.bf16.mxu0 0
      %472 = vmatpush1.bf16.msra.mxu0 0
      %473 = vmatprep.subr.bf16.mxu0 0
      %474 = vmatpush1.bf16.msra.mxu0 0
      %475 = vmatprep.subr.bf16.mxu0 0
      %476 = vmatpush1.bf16.msra.mxu0 0
      %477 = vmatprep.subr.bf16.mxu0 0
      %478 = vmatpush1.bf16.msra.mxu0 0
      %479 = vmatprep.subr.bf16.mxu0 0
      %480 = vmatpush1.bf16.msra.mxu0 0
      %481 = vmatprep.subr.bf16.mxu0 0
      %482 = vmatpush1.bf16.msra.mxu0 %v417
      %483 = vmatprep.subr.bf16.mxu0 0
      %484 = vmatpush1.bf16.msra.mxu0 %v416
      %485 = vmatprep.subr.bf16.mxu0 0
      %486 = vmatpush2.bf16.msra.mxu0 0
      %487 = vmatprep.subr.bf16.mxu0 0
      %488 = vmatpush2.bf16.msra.mxu0 0
      %489 = vmatprep.subr.bf16.mxu0 0
      %490 = vmatpush2.bf16.msra.mxu0 0
      %491 = vmatprep.subr.bf16.mxu0 0
      %492 = vmatpush2.bf16.msra.mxu0 0
      %493 = vmatprep.subr.bf16.mxu0 0
      %494 = vmatpush2.bf16.msra.mxu0 0
      %495 = vmatprep.subr.bf16.mxu0 0
      %496 = vmatpush2.bf16.msra.mxu0 0
      %497 = vmatprep.subr.bf16.mxu0 0
      %498 = vmatpush2.bf16.msra.mxu0 0
      %499 = vmatprep.subr.bf16.mxu0 0
      %500 = vmatpush2.bf16.msra.mxu0 0
      %501 = vmatprep.mubr.bf16.mxu0 0
      %502 = vmatmul.mubr.bf16.gmra.mxu0 %v422
      %v503 = vpop.f32.mrf.mxu0
      %v504 = vadd.f32 %v326, %v503
      %v505 = vpop.f32.mrf.mxu0
      %v506 = vpop.f32.mrf.mxu0
      %v507 = vadd.f32 %v326, %v506
      %v508 = vpop.f32.mrf.mxu0
      %509 = vmatprep.mubr.bf16.mxu0 0
      %510 = vmatmul.mubr.bf16.gmra.mxu0 %v425
      %v511 = vpop.f32.mrf.mxu0
      %v512 = vadd.f32 %v326, %v511
      %v513 = vpop.f32.mrf.mxu0
      %v514 = vpop.f32.mrf.mxu0
      %v515 = vadd.f32 %v326, %v514
      %v516 = vpop.f32.mrf.mxu0
      %517 = vmatprep.mubr.bf16.mxu0 0
      %518 = vmatmul.mubr.bf16.gmra.mxu0 %v428
      %v519 = vpop.f32.mrf.mxu0
      %v520 = vadd.f32 %v326, %v519
      %v521 = vpop.f32.mrf.mxu0
      %v522 = vpop.f32.mrf.mxu0
      %v523 = vadd.f32 %v326, %v522
      %v524 = vpop.f32.mrf.mxu0
      %525 = vmatprep.mubr.bf16.mxu0 0
      %526 = vmatmul.mubr.bf16.gmra.mxu0 %v431
      %v527 = vpop.f32.mrf.mxu0
      %v528 = vadd.f32 %v326, %v527
      %v529 = vpop.f32.mrf.mxu0
      %v530 = vpop.f32.mrf.mxu0
      %v531 = vadd.f32 %v326, %v530
      %v532 = vpop.f32.mrf.mxu0
      %533 = vmatprep.mubr.bf16.mxu0 0
      %534 = vmatmul.mubr.bf16.gmra.mxu0 %v434
      %v535 = vpop.f32.mrf.mxu0
      %v536 = vadd.f32 %v326, %v535
      %v537 = vpop.f32.mrf.mxu0
      %v538 = vpop.f32.mrf.mxu0
      %v539 = vadd.f32 %v326, %v538
      %v540 = vpop.f32.mrf.mxu0
      %541 = vmatprep.mubr.bf16.mxu0 0
      %542 = vmatmul.mubr.bf16.gmra.mxu0 %v437
      %v543 = vpop.f32.mrf.mxu0
      %v544 = vadd.f32 %v326, %v543
      %v545 = vpop.f32.mrf.mxu0
      %v546 = vpop.f32.mrf.mxu0
      %v547 = vadd.f32 %v326, %v546
      %v548 = vpop.f32.mrf.mxu0
      %549 = vmatprep.mubr.bf16.mxu0 0
      %550 = vmatmul.mubr.bf16.gmra.mxu0 %v440
      %v551 = vpop.f32.mrf.mxu0
      %v552 = vadd.f32 %v326, %v551
      %v553 = vpop.f32.mrf.mxu0
      %v554 = vpop.f32.mrf.mxu0
      %v555 = vadd.f32 %v326, %v554
      %v556 = vpop.f32.mrf.mxu0
      %557 = vmatprep.mubr.bf16.mxu0 0
      %558 = vmatmul.mubr.bf16.gmra.mxu0 %v443
      %v559 = vpop.f32.mrf.mxu0
      %v560 = vadd.f32 %v326, %v559
      %v561 = vpop.f32.mrf.mxu0
      %v562 = vpop.f32.mrf.mxu0
      %v563 = vadd.f32 %v326, %v562
      %v564 = vpop.f32.mrf.mxu0
      %565 = vmatprep.mubr.bf16.mxu0 0
      %566 = vmatmul.mubr.bf16.gmra.mxu0 %v446
      %v567 = vpop.f32.mrf.mxu0
      %v568 = vadd.f32 %v326, %v567
      %v569 = vpop.f32.mrf.mxu0
      %v570 = vpop.f32.mrf.mxu0
      %v571 = vadd.f32 %v326, %v570
      %v572 = vpop.f32.mrf.mxu0
      %573 = vmatprep.mubr.bf16.mxu0 0
      %574 = vmatmul.mubr.bf16.gmra.mxu0 %v449
      %v575 = vpop.f32.mrf.mxu0
      %v576 = vadd.f32 %v326, %v575
      %v577 = vpop.f32.mrf.mxu0
      %v578 = vpop.f32.mrf.mxu0
      %v579 = vadd.f32 %v326, %v578
      %v580 = vpop.f32.mrf.mxu0
      %581 = vmatprep.mubr.bf16.mxu0 0
      %582 = vmatmul.mubr.bf16.gmra.mxu0 %v452
      %v583 = vpop.f32.mrf.mxu0
      %v584 = vadd.f32 %v326, %v583
      %v585 = vpop.f32.mrf.mxu0
      %v586 = vpop.f32.mrf.mxu0
      %v587 = vadd.f32 %v326, %v586
      %v588 = vpop.f32.mrf.mxu0
      %589 = vmatprep.mubr.bf16.mxu0 0
      %590 = vmatmul.mubr.bf16.gmra.mxu0 %v455
      %v591 = vpop.f32.mrf.mxu0
      %v592 = vadd.f32 %v326, %v591
      %v593 = vpop.f32.mrf.mxu0
      %v594 = vpop.f32.mrf.mxu0
      %v595 = vadd.f32 %v326, %v594
      %v596 = vpop.f32.mrf.mxu0
      %597 = vmatprep.mubr.bf16.mxu0 0
      %598 = vmatmul.mubr.bf16.gmra.mxu0 %v458
      %v599 = vpop.f32.mrf.mxu0
      %v600 = vadd.f32 %v326, %v599
      %v601 = vpop.f32.mrf.mxu0
      %v602 = vpop.f32.mrf.mxu0
      %v603 = vadd.f32 %v326, %v602
      %v604 = vpop.f32.mrf.mxu0
      %605 = vmatprep.mubr.bf16.mxu0 0
      %606 = vmatmul.mubr.bf16.gmra.mxu0 %v461
      %v607 = vpop.f32.mrf.mxu0
      %v608 = vadd.f32 %v326, %v607
      %v609 = vpop.f32.mrf.mxu0
      %v610 = vpop.f32.mrf.mxu0
      %v611 = vadd.f32 %v326, %v610
      %v612 = vpop.f32.mrf.mxu0
      %613 = vmatprep.mubr.bf16.mxu0 0
      %614 = vmatmul.mubr.bf16.gmra.mxu0 %v464
      %v615 = vpop.f32.mrf.mxu0
      %v616 = vadd.f32 %v326, %v615
      %v617 = vpop.f32.mrf.mxu0
      %v618 = vpop.f32.mrf.mxu0
      %v619 = vadd.f32 %v326, %v618
      %v620 = vpop.f32.mrf.mxu0
      %621 = vmatprep.mubr.bf16.mxu0 0
      %622 = vmatmul.mubr.bf16.gmra.mxu0 %v467
      %v623 = vpop.f32.mrf.mxu0
      %v624 = vadd.f32 %v326, %v623
      %v625 = vpop.f32.mrf.mxu0
      %v626 = vpop.f32.mrf.mxu0
      %v627 = vadd.f32 %v326, %v626
      %v628 = vpop.f32.mrf.mxu0
      %629 = vdwg.mxu0
      %v630 = vmax.f32 %v504, 0.0
      %v631 = vmax.f32 %v507, 0.0
      %v632 = vmax.f32 %v512, 0.0
      %v633 = vmax.f32 %v515, 0.0
      %v634 = vmax.f32 %v520, 0.0
      %v635 = vmax.f32 %v523, 0.0
      %v636 = vmax.f32 %v528, 0.0
      %v637 = vmax.f32 %v531, 0.0
      %v638 = vmax.f32 %v536, 0.0
      %v639 = vmax.f32 %v539, 0.0
      %v640 = vmax.f32 %v544, 0.0
      %v641 = vmax.f32 %v547, 0.0
      %v642 = vmax.f32 %v552, 0.0
      %v643 = vmax.f32 %v555, 0.0
      %v644 = vmax.f32 %v560, 0.0
      %v645 = vmax.f32 %v563, 0.0
      %v646 = vmax.f32 %v568, 0.0
      %v647 = vmax.f32 %v571, 0.0
      %v648 = vmax.f32 %v576, 0.0
      %v649 = vmax.f32 %v579, 0.0
      %v650 = vmax.f32 %v584, 0.0
      %v651 = vmax.f32 %v587, 0.0
      %v652 = vmax.f32 %v592, 0.0
      %v653 = vmax.f32 %v595, 0.0
      %v654 = vmax.f32 %v600, 0.0
      %v655 = vmax.f32 %v603, 0.0
      %v656 = vmax.f32 %v608, 0.0
      %v657 = vmax.f32 %v611, 0.0
      %v658 = vmax.f32 %v616, 0.0
      %v659 = vmax.f32 %v619, 0.0
      %v660 = vmax.f32 %v624, 0.0
      %v661 = vmax.f32 %v627, 0.0
      %v662 = vpack.c.bf16 %v631, %v630
      %v663 = vpack.c.bf16 %v633, %v632
      %v664 = vpack.c.bf16 %v635, %v634
      %v665 = vpack.c.bf16 %v637, %v636
      %v666 = vpack.c.bf16 %v639, %v638
      %v667 = vpack.c.bf16 %v641, %v640
      %v668 = vpack.c.bf16 %v643, %v642
      %v669 = vpack.c.bf16 %v645, %v644
      %v670 = vpack.c.bf16 %v647, %v646
      %v671 = vpack.c.bf16 %v649, %v648
      %v672 = vpack.c.bf16 %v651, %v650
      %v673 = vpack.c.bf16 %v653, %v652
      %v674 = vpack.c.bf16 %v655, %v654
      %v675 = vpack.c.bf16 %v657, %v656
      %v676 = vpack.c.bf16 %v659, %v658
      %v677 = vpack.c.bf16 %v661, %v660
      %v678 = vld [vmem:[%s3] sm:$0xf]
      %v679 = vld [vmem:[%s3 + $0x4] sm:$0xf]
      %v680 = vld [vmem:[%s3 + $0x8] sm:$0xf]
      %v681 = vld [vmem:[%s3 + $0xc] sm:$0xf]
      %v682 = vld [vmem:[%s3 + $0x10] sm:$0xf]
      %v683 = vld [vmem:[%s3 + $0x14] sm:$0xf]
      %v684 = vld [vmem:[%s3 + $0x18] sm:$0xf]
      %v685 = vld [vmem:[%s3 + $0x1c] sm:$0xf]
      %v686 = vld [vmem:[%s4] sm:$0x1]
      %v688 = vlaneseq
      %v689 = vshrl.u32 %v688, 7
      %v690 = vsub.s32 0, %v689
      %v691 = vrot.slane %v686, %v690
      %v701 = vunpack.c.l.b16 %v678
      %v702 = vunpack.c.l.b16 %v679
      %v703 = vunpack.c.l.b16 %v680
      %v704 = vunpack.c.l.b16 %v681
      %v705 = vunpack.c.l.b16 %v682
      %v706 = vunpack.c.l.b16 %v683
      %v707 = vunpack.c.l.b16 %v684
      %v708 = vunpack.c.l.b16 %v685
      %v709 = vpack.c.b16 %v702, %v701
      %v710 = vpack.c.b16 %v704, %v703
      %v711 = vpack.c.b16 %v706, %v705
      %v712 = vpack.c.b16 %v708, %v707
      %vm717 = vcmask 523264
      %v719 = vsel %vm717, %v662, 0
      %v722 = vsel %vm717, %v663, 0
      %v725 = vsel %vm717, %v664, 0
      %v728 = vsel %vm717, %v665, 0
      %v731 = vsel %vm717, %v666, 0
      %v734 = vsel %vm717, %v667, 0
      %v737 = vsel %vm717, %v668, 0
      %v740 = vsel %vm717, %v669, 0
      %v743 = vsel %vm717, %v670, 0
      %v746 = vsel %vm717, %v671, 0
      %v749 = vsel %vm717, %v672, 0
      %v752 = vsel %vm717, %v673, 0
      %v755 = vsel %vm717, %v674, 0
      %v758 = vsel %vm717, %v675, 0
      %v761 = vsel %vm717, %v676, 0
      %v764 = vsel %vm717, %v677, 0
      %766 = vmatprep.subr.bf16.mxu0 0
      %767 = vmatpush1.bf16.msra.mxu0 0
      %768 = vmatprep.subr.bf16.mxu0 0
      %769 = vmatpush1.bf16.msra.mxu0 0
      %770 = vmatprep.subr.bf16.mxu0 0
      %771 = vmatpush1.bf16.msra.mxu0 0
      %772 = vmatprep.subr.bf16.mxu0 0
      %773 = vmatpush1.bf16.msra.mxu0 0
      %774 = vmatprep.subr.bf16.mxu0 0
      %775 = vmatpush1.bf16.msra.mxu0 %v712
      %776 = vmatprep.subr.bf16.mxu0 0
      %777 = vmatpush1.bf16.msra.mxu0 %v711
      %778 = vmatprep.subr.bf16.mxu0 0
      %779 = vmatpush1.bf16.msra.mxu0 %v710
      %780 = vmatprep.subr.bf16.mxu0 0
      %781 = vmatpush1.bf16.msra.mxu0 %v709
      %782 = vmatprep.subr.bf16.mxu0 0
      %783 = vmatpush2.bf16.msra.mxu0 0
      %784 = vmatprep.subr.bf16.mxu0 0
      %785 = vmatpush2.bf16.msra.mxu0 0
      %786 = vmatprep.subr.bf16.mxu0 0
      %787 = vmatpush2.bf16.msra.mxu0 0
      %788 = vmatprep.subr.bf16.mxu0 0
      %789 = vmatpush2.bf16.msra.mxu0 0
      %790 = vmatprep.subr.bf16.mxu0 0
      %791 = vmatpush2.bf16.msra.mxu0 0
      %792 = vmatprep.subr.bf16.mxu0 0
      %793 = vmatpush2.bf16.msra.mxu0 0
      %794 = vmatprep.subr.bf16.mxu0 0
      %795 = vmatpush2.bf16.msra.mxu0 0
      %796 = vmatprep.subr.bf16.mxu0 0
      %797 = vmatpush2.bf16.msra.mxu0 0
      %798 = vmatprep.mubr.bf16.mxu0 0
      %799 = vmatmul.mubr.bf16.gmra.mxu0 %v719
      %v800 = vpop.f32.mrf.mxu0
      %v801 = vadd.f32 %v691, %v800
      %v802 = vpop.f32.mrf.mxu0
      %v803 = vpop.f32.mrf.mxu0
      %v804 = vadd.f32 %v691, %v803
      %v805 = vpop.f32.mrf.mxu0
      %806 = vmatprep.mubr.bf16.mxu0 0
      %807 = vmatmul.mubr.bf16.gmra.mxu0 %v722
      %v808 = vpop.f32.mrf.mxu0
      %v809 = vadd.f32 %v691, %v808
      %v810 = vpop.f32.mrf.mxu0
      %v811 = vpop.f32.mrf.mxu0
      %v812 = vadd.f32 %v691, %v811
      %v813 = vpop.f32.mrf.mxu0
      %814 = vmatprep.mubr.bf16.mxu0 0
      %815 = vmatmul.mubr.bf16.gmra.mxu0 %v725
      %v816 = vpop.f32.mrf.mxu0
      %v817 = vadd.f32 %v691, %v816
      %v818 = vpop.f32.mrf.mxu0
      %v819 = vpop.f32.mrf.mxu0
      %v820 = vadd.f32 %v691, %v819
      %v821 = vpop.f32.mrf.mxu0
      %822 = vmatprep.mubr.bf16.mxu0 0
      %823 = vmatmul.mubr.bf16.gmra.mxu0 %v728
      %v824 = vpop.f32.mrf.mxu0
      %v825 = vadd.f32 %v691, %v824
      %v826 = vpop.f32.mrf.mxu0
      %v827 = vpop.f32.mrf.mxu0
      %v828 = vadd.f32 %v691, %v827
      %v829 = vpop.f32.mrf.mxu0
      %830 = vmatprep.mubr.bf16.mxu0 0
      %831 = vmatmul.mubr.bf16.gmra.mxu0 %v731
      %v832 = vpop.f32.mrf.mxu0
      %v833 = vadd.f32 %v691, %v832
      %v834 = vpop.f32.mrf.mxu0
      %v835 = vpop.f32.mrf.mxu0
      %v836 = vadd.f32 %v691, %v835
      %v837 = vpop.f32.mrf.mxu0
      %838 = vmatprep.mubr.bf16.mxu0 0
      %839 = vmatmul.mubr.bf16.gmra.mxu0 %v734
      %v840 = vpop.f32.mrf.mxu0
      %v841 = vadd.f32 %v691, %v840
      %v842 = vpop.f32.mrf.mxu0
      %v843 = vpop.f32.mrf.mxu0
      %v844 = vadd.f32 %v691, %v843
      %v845 = vpop.f32.mrf.mxu0
      %846 = vmatprep.mubr.bf16.mxu0 0
      %847 = vmatmul.mubr.bf16.gmra.mxu0 %v737
      %v848 = vpop.f32.mrf.mxu0
      %v849 = vadd.f32 %v691, %v848
      %v850 = vpop.f32.mrf.mxu0
      %v851 = vpop.f32.mrf.mxu0
      %v852 = vadd.f32 %v691, %v851
      %v853 = vpop.f32.mrf.mxu0
      %854 = vmatprep.mubr.bf16.mxu0 0
      %855 = vmatmul.mubr.bf16.gmra.mxu0 %v740
      %v856 = vpop.f32.mrf.mxu0
      %v857 = vadd.f32 %v691, %v856
      %v858 = vpop.f32.mrf.mxu0
      %v859 = vpop.f32.mrf.mxu0
      %v860 = vadd.f32 %v691, %v859
      %v861 = vpop.f32.mrf.mxu0
      %862 = vmatprep.mubr.bf16.mxu0 0
      %863 = vmatmul.mubr.bf16.gmra.mxu0 %v743
      %v864 = vpop.f32.mrf.mxu0
      %v865 = vadd.f32 %v691, %v864
      %v866 = vpop.f32.mrf.mxu0
      %v867 = vpop.f32.mrf.mxu0
      %v868 = vadd.f32 %v691, %v867
      %v869 = vpop.f32.mrf.mxu0
      %870 = vmatprep.mubr.bf16.mxu0 0
      %871 = vmatmul.mubr.bf16.gmra.mxu0 %v746
      %v872 = vpop.f32.mrf.mxu0
      %v873 = vadd.f32 %v691, %v872
      %v874 = vpop.f32.mrf.mxu0
      %v875 = vpop.f32.mrf.mxu0
      %v876 = vadd.f32 %v691, %v875
      %v877 = vpop.f32.mrf.mxu0
      %878 = vmatprep.mubr.bf16.mxu0 0
      %879 = vmatmul.mubr.bf16.gmra.mxu0 %v749
      %v880 = vpop.f32.mrf.mxu0
      %v881 = vadd.f32 %v691, %v880
      %v882 = vpop.f32.mrf.mxu0
      %v883 = vpop.f32.mrf.mxu0
      %v884 = vadd.f32 %v691, %v883
      %v885 = vpop.f32.mrf.mxu0
      %886 = vmatprep.mubr.bf16.mxu0 0
      %887 = vmatmul.mubr.bf16.gmra.mxu0 %v752
      %v888 = vpop.f32.mrf.mxu0
      %v889 = vadd.f32 %v691, %v888
      %v890 = vpop.f32.mrf.mxu0
      %v891 = vpop.f32.mrf.mxu0
      %v892 = vadd.f32 %v691, %v891
      %v893 = vpop.f32.mrf.mxu0
      %894 = vmatprep.mubr.bf16.mxu0 0
      %895 = vmatmul.mubr.bf16.gmra.mxu0 %v755
      %v896 = vpop.f32.mrf.mxu0
      %v897 = vadd.f32 %v691, %v896
      %v898 = vpop.f32.mrf.mxu0
      %v899 = vpop.f32.mrf.mxu0
      %v900 = vadd.f32 %v691, %v899
      %v901 = vpop.f32.mrf.mxu0
      %902 = vmatprep.mubr.bf16.mxu0 0
      %903 = vmatmul.mubr.bf16.gmra.mxu0 %v758
      %v904 = vpop.f32.mrf.mxu0
      %v905 = vadd.f32 %v691, %v904
      %v906 = vpop.f32.mrf.mxu0
      %v907 = vpop.f32.mrf.mxu0
      %v908 = vadd.f32 %v691, %v907
      %v909 = vpop.f32.mrf.mxu0
      %910 = vmatprep.mubr.bf16.mxu0 0
      %911 = vmatmul.mubr.bf16.gmra.mxu0 %v761
      %v912 = vpop.f32.mrf.mxu0
      %v913 = vadd.f32 %v691, %v912
      %v914 = vpop.f32.mrf.mxu0
      %v915 = vpop.f32.mrf.mxu0
      %v916 = vadd.f32 %v691, %v915
      %v917 = vpop.f32.mrf.mxu0
      %918 = vmatprep.mubr.bf16.mxu0 0
      %919 = vmatmul.mubr.bf16.gmra.mxu0 %v764
      %v920 = vpop.f32.mrf.mxu0
      %v921 = vadd.f32 %v691, %v920
      %v922 = vpop.f32.mrf.mxu0
      %v923 = vpop.f32.mrf.mxu0
      %v924 = vadd.f32 %v691, %v923
      %v925 = vpop.f32.mrf.mxu0
      %926 = vdwg.mxu0
      %v927 = vmax.f32 %v801, 0.0
      %v928 = vmax.f32 %v804, 0.0
      %v929 = vmax.f32 %v809, 0.0
      %v930 = vmax.f32 %v812, 0.0
      %v931 = vmax.f32 %v817, 0.0
      %v932 = vmax.f32 %v820, 0.0
      %v933 = vmax.f32 %v825, 0.0
      %v934 = vmax.f32 %v828, 0.0
      %v935 = vmax.f32 %v833, 0.0
      %v936 = vmax.f32 %v836, 0.0
      %v937 = vmax.f32 %v841, 0.0
      %v938 = vmax.f32 %v844, 0.0
      %v939 = vmax.f32 %v849, 0.0
      %v940 = vmax.f32 %v852, 0.0
      %v941 = vmax.f32 %v857, 0.0
      %v942 = vmax.f32 %v860, 0.0
      %v943 = vmax.f32 %v865, 0.0
      %v944 = vmax.f32 %v868, 0.0
      %v945 = vmax.f32 %v873, 0.0
      %v946 = vmax.f32 %v876, 0.0
      %v947 = vmax.f32 %v881, 0.0
      %v948 = vmax.f32 %v884, 0.0
      %v949 = vmax.f32 %v889, 0.0
      %v950 = vmax.f32 %v892, 0.0
      %v951 = vmax.f32 %v897, 0.0
      %v952 = vmax.f32 %v900, 0.0
      %v953 = vmax.f32 %v905, 0.0
      %v954 = vmax.f32 %v908, 0.0
      %v955 = vmax.f32 %v913, 0.0
      %v956 = vmax.f32 %v916, 0.0
      %v957 = vmax.f32 %v921, 0.0
      %v958 = vmax.f32 %v924, 0.0
      %v959 = vld [vmem:[%s5] sm:$0x1]
      %v961 = vlaneseq
      %v962 = vshrl.u32 %v961, 7
      %v963 = vsub.s32 0, %v962
      %v964 = vrot.slane %v959, %v963
      %v966 = vmul.f32 %v927, %v964
      %v967 = vmul.f32 %v928, %v964
      %v968 = vmul.f32 %v929, %v964
      %v969 = vmul.f32 %v930, %v964
      %v970 = vmul.f32 %v931, %v964
      %v971 = vmul.f32 %v932, %v964
      %v972 = vmul.f32 %v933, %v964
      %v973 = vmul.f32 %v934, %v964
      %v974 = vmul.f32 %v935, %v964
      %v975 = vmul.f32 %v936, %v964
      %v976 = vmul.f32 %v937, %v964
      %v977 = vmul.f32 %v938, %v964
      %v978 = vmul.f32 %v939, %v964
      %v979 = vmul.f32 %v940, %v964
      %v980 = vmul.f32 %v941, %v964
      %v981 = vmul.f32 %v942, %v964
      %v982 = vmul.f32 %v943, %v964
      %v983 = vmul.f32 %v944, %v964
      %v984 = vmul.f32 %v945, %v964
      %v985 = vmul.f32 %v946, %v964
      %v986 = vmul.f32 %v947, %v964
      %v987 = vmul.f32 %v948, %v964
      %v988 = vmul.f32 %v949, %v964
      %v989 = vmul.f32 %v950, %v964
      %v990 = vmul.f32 %v951, %v964
      %v991 = vmul.f32 %v952, %v964
      %v992 = vmul.f32 %v953, %v964
      %v993 = vmul.f32 %v954, %v964
      %v994 = vmul.f32 %v955, %v964
      %v995 = vmul.f32 %v956, %v964
      %v996 = vmul.f32 %v957, %v964
      %v997 = vmul.f32 %v958, %v964
      %v998 = vsel %vm420, %v966, 0.0
      %999 = vadd.xlane.f32.xlu0 %v998
      %v1000 = vpop.xlane.xlu0 %999
      %v1001 = vsel %vm420, %v967, 0.0
      %1002 = vadd.xlane.f32.xlu0 %v1001
      %v1003 = vpop.xlane.xlu0 %1002
      %v1004 = vsel %vm420, %v968, 0.0
      %1005 = vadd.xlane.f32.xlu0 %v1004
      %v1006 = vpop.xlane.xlu0 %1005
      %v1007 = vsel %vm420, %v969, 0.0
      %1008 = vadd.xlane.f32.xlu0 %v1007
      %v1009 = vpop.xlane.xlu0 %1008
      %v1010 = vsel %vm420, %v970, 0.0
      %1011 = vadd.xlane.f32.xlu0 %v1010
      %v1012 = vpop.xlane.xlu0 %1011
      %v1013 = vsel %vm420, %v971, 0.0
      %1014 = vadd.xlane.f32.xlu0 %v1013
      %v1015 = vpop.xlane.xlu0 %1014
      %v1016 = vsel %vm420, %v972, 0.0
      %1017 = vadd.xlane.f32.xlu0 %v1016
      %v1018 = vpop.xlane.xlu0 %1017
      %v1019 = vsel %vm420, %v973, 0.0
      %1020 = vadd.xlane.f32.xlu0 %v1019
      %v1021 = vpop.xlane.xlu0 %1020
      %v1022 = vsel %vm420, %v974, 0.0
      %1023 = vadd.xlane.f32.xlu0 %v1022
      %v1024 = vpop.xlane.xlu0 %1023
      %v1025 = vsel %vm420, %v975, 0.0
      %1026 = vadd.xlane.f32.xlu0 %v1025
      %v1027 = vpop.xlane.xlu0 %1026
      %v1028 = vsel %vm420, %v976, 0.0
      %1029 = vadd.xlane.f32.xlu0 %v1028
      %v1030 = vpop.xlane.xlu0 %1029
      %v1031 = vsel %vm420, %v977, 0.0
      %1032 = vadd.xlane.f32.xlu0 %v1031
      %v1033 = vpop.xlane.xlu0 %1032
      %v1034 = vsel %vm420, %v978, 0.0
      %1035 = vadd.xlane.f32.xlu0 %v1034
      %v1036 = vpop.xlane.xlu0 %1035
      %v1037 = vsel %vm420, %v979, 0.0
      %1038 = vadd.xlane.f32.xlu0 %v1037
      %v1039 = vpop.xlane.xlu0 %1038
      %v1040 = vsel %vm420, %v980, 0.0
      %1041 = vadd.xlane.f32.xlu0 %v1040
      %v1042 = vpop.xlane.xlu0 %1041
      %v1043 = vsel %vm420, %v981, 0.0
      %1044 = vadd.xlane.f32.xlu0 %v1043
      %v1045 = vpop.xlane.xlu0 %1044
      %v1046 = vsel %vm420, %v982, 0.0
      %1047 = vadd.xlane.f32.xlu0 %v1046
      %v1048 = vpop.xlane.xlu0 %1047
      %v1049 = vsel %vm420, %v983, 0.0
      %1050 = vadd.xlane.f32.xlu0 %v1049
      %v1051 = vpop.xlane.xlu0 %1050
      %v1052 = vsel %vm420, %v984, 0.0
      %1053 = vadd.xlane.f32.xlu0 %v1052
      %v1054 = vpop.xlane.xlu0 %1053
      %v1055 = vsel %vm420, %v985, 0.0
      %1056 = vadd.xlane.f32.xlu0 %v1055
      %v1057 = vpop.xlane.xlu0 %1056
      %v1058 = vsel %vm420, %v986, 0.0
      %1059 = vadd.xlane.f32.xlu0 %v1058
      %v1060 = vpop.xlane.xlu0 %1059
      %v1061 = vsel %vm420, %v987, 0.0
      %1062 = vadd.xlane.f32.xlu0 %v1061
      %v1063 = vpop.xlane.xlu0 %1062
      %v1064 = vsel %vm420, %v988, 0.0
      %1065 = vadd.xlane.f32.xlu0 %v1064
      %v1066 = vpop.xlane.xlu0 %1065
      %v1067 = vsel %vm420, %v989, 0.0
      %1068 = vadd.xlane.f32.xlu0 %v1067
      %v1069 = vpop.xlane.xlu0 %1068
      %v1070 = vsel %vm420, %v990, 0.0
      %1071 = vadd.xlane.f32.xlu0 %v1070
      %v1072 = vpop.xlane.xlu0 %1071
      %v1073 = vsel %vm420, %v991, 0.0
      %1074 = vadd.xlane.f32.xlu0 %v1073
      %v1075 = vpop.xlane.xlu0 %1074
      %v1076 = vsel %vm420, %v992, 0.0
      %1077 = vadd.xlane.f32.xlu0 %v1076
      %v1078 = vpop.xlane.xlu0 %1077
      %v1079 = vsel %vm420, %v993, 0.0
      %1080 = vadd.xlane.f32.xlu0 %v1079
      %v1081 = vpop.xlane.xlu0 %1080
      %v1082 = vsel %vm420, %v994, 0.0
      %1083 = vadd.xlane.f32.xlu0 %v1082
      %v1084 = vpop.xlane.xlu0 %1083
      %v1085 = vsel %vm420, %v995, 0.0
      %1086 = vadd.xlane.f32.xlu0 %v1085
      %v1087 = vpop.xlane.xlu0 %1086
      %v1088 = vsel %vm420, %v996, 0.0
      %1089 = vadd.xlane.f32.xlu0 %v1088
      %v1090 = vpop.xlane.xlu0 %1089
      %v1091 = vsel %vm420, %v997, 0.0
      %1092 = vadd.xlane.f32.xlu0 %v1091
      %v1093 = vpop.xlane.xlu0 %1092
      %v1094 = vld [vmem:[#allocation2] sm:$0x1]
      %v1096 = vlaneseq
      %v1097 = vshrl.u32 %v1096, 7
      %v1098 = vsub.s32 0, %v1097
      %v1099 = vrot.slane %v1094, %v1098
      %v1101 = vadd.f32 %v1000, %v1099
      %v1102 = vadd.f32 %v1003, %v1099
      %v1103 = vadd.f32 %v1006, %v1099
      %v1104 = vadd.f32 %v1009, %v1099
      %v1105 = vadd.f32 %v1012, %v1099
      %v1106 = vadd.f32 %v1015, %v1099
      %v1107 = vadd.f32 %v1018, %v1099
      %v1108 = vadd.f32 %v1021, %v1099
      %v1109 = vadd.f32 %v1024, %v1099
      %v1110 = vadd.f32 %v1027, %v1099
      %v1111 = vadd.f32 %v1030, %v1099
      %v1112 = vadd.f32 %v1033, %v1099
      %v1113 = vadd.f32 %v1036, %v1099
      %v1114 = vadd.f32 %v1039, %v1099
      %v1115 = vadd.f32 %v1042, %v1099
      %v1116 = vadd.f32 %v1045, %v1099
      %v1117 = vadd.f32 %v1048, %v1099
      %v1118 = vadd.f32 %v1051, %v1099
      %v1119 = vadd.f32 %v1054, %v1099
      %v1120 = vadd.f32 %v1057, %v1099
      %v1121 = vadd.f32 %v1060, %v1099
      %v1122 = vadd.f32 %v1063, %v1099
      %v1123 = vadd.f32 %v1066, %v1099
      %v1124 = vadd.f32 %v1069, %v1099
      %v1125 = vadd.f32 %v1072, %v1099
      %v1126 = vadd.f32 %v1075, %v1099
      %v1127 = vadd.f32 %v1078, %v1099
      %v1128 = vadd.f32 %v1081, %v1099
      %v1129 = vadd.f32 %v1084, %v1099
      %v1130 = vadd.f32 %v1087, %v1099
      %v1131 = vadd.f32 %v1090, %v1099
      %v1132 = vadd.f32 %v1093, %v1099
      %v1133 = vsub.f32 0.0, %v1101
      %v1134 = vsub.f32 0.0, %v1102
      %v1135 = vsub.f32 0.0, %v1103
      %v1136 = vsub.f32 0.0, %v1104
      %v1137 = vsub.f32 0.0, %v1105
      %v1138 = vsub.f32 0.0, %v1106
      %v1139 = vsub.f32 0.0, %v1107
      %v1140 = vsub.f32 0.0, %v1108
      %v1141 = vsub.f32 0.0, %v1109
      %v1142 = vsub.f32 0.0, %v1110
      %v1143 = vsub.f32 0.0, %v1111
      %v1144 = vsub.f32 0.0, %v1112
      %v1145 = vsub.f32 0.0, %v1113
      %v1146 = vsub.f32 0.0, %v1114
      %v1147 = vsub.f32 0.0, %v1115
      %v1148 = vsub.f32 0.0, %v1116
      %v1149 = vsub.f32 0.0, %v1117
      %v1150 = vsub.f32 0.0, %v1118
      %v1151 = vsub.f32 0.0, %v1119
      %v1152 = vsub.f32 0.0, %v1120
      %v1153 = vsub.f32 0.0, %v1121
      %v1154 = vsub.f32 0.0, %v1122
      %v1155 = vsub.f32 0.0, %v1123
      %v1156 = vsub.f32 0.0, %v1124
      %v1157 = vsub.f32 0.0, %v1125
      %v1158 = vsub.f32 0.0, %v1126
      %v1159 = vsub.f32 0.0, %v1127
      %v1160 = vsub.f32 0.0, %v1128
      %v1161 = vsub.f32 0.0, %v1129
      %v1162 = vsub.f32 0.0, %v1130
      %v1163 = vsub.f32 0.0, %v1131
      %v1164 = vsub.f32 0.0, %v1132
      %v1165 = vmul.f32 %v1133, 1.442695
      %v1166 = vpow.pop %v1165
      %v1167 = vmul.f32 %v1134, 1.442695
      %v1168 = vpow.pop %v1167
      %v1169 = vmul.f32 %v1135, 1.442695
      %v1170 = vpow.pop %v1169
      %v1171 = vmul.f32 %v1136, 1.442695
      %v1172 = vpow.pop %v1171
      %v1173 = vmul.f32 %v1137, 1.442695
      %v1174 = vpow.pop %v1173
      %v1175 = vmul.f32 %v1138, 1.442695
      %v1176 = vpow.pop %v1175
      %v1177 = vmul.f32 %v1139, 1.442695
      %v1178 = vpow.pop %v1177
      %v1179 = vmul.f32 %v1140, 1.442695
      %v1180 = vpow.pop %v1179
      %v1181 = vmul.f32 %v1141, 1.442695
      %v1182 = vpow.pop %v1181
      %v1183 = vmul.f32 %v1142, 1.442695
      %v1184 = vpow.pop %v1183
      %v1185 = vmul.f32 %v1143, 1.442695
      %v1186 = vpow.pop %v1185
      %v1187 = vmul.f32 %v1144, 1.442695
      %v1188 = vpow.pop %v1187
      %v1189 = vmul.f32 %v1145, 1.442695
      %v1190 = vpow.pop %v1189
      %v1191 = vmul.f32 %v1146, 1.442695
      %v1192 = vpow.pop %v1191
      %v1193 = vmul.f32 %v1147, 1.442695
      %v1194 = vpow.pop %v1193
      %v1195 = vmul.f32 %v1148, 1.442695
      %v1196 = vpow.pop %v1195
      %v1197 = vmul.f32 %v1149, 1.442695
      %v1198 = vpow.pop %v1197
      %v1199 = vmul.f32 %v1150, 1.442695
      %v1200 = vpow.pop %v1199
      %v1201 = vmul.f32 %v1151, 1.442695
      %v1202 = vpow.pop %v1201
      %v1203 = vmul.f32 %v1152, 1.442695
      %v1204 = vpow.pop %v1203
      %v1205 = vmul.f32 %v1153, 1.442695
      %v1206 = vpow.pop %v1205
      %v1207 = vmul.f32 %v1154, 1.442695
      %v1208 = vpow.pop %v1207
      %v1209 = vmul.f32 %v1155, 1.442695
      %v1210 = vpow.pop %v1209
      %v1211 = vmul.f32 %v1156, 1.442695
      %v1212 = vpow.pop %v1211
      %v1213 = vmul.f32 %v1157, 1.442695
      %v1214 = vpow.pop %v1213
      %v1215 = vmul.f32 %v1158, 1.442695
      %v1216 = vpow.pop %v1215
      %v1217 = vmul.f32 %v1159, 1.442695
      %v1218 = vpow.pop %v1217
      %v1219 = vmul.f32 %v1160, 1.442695
      %v1220 = vpow.pop %v1219
      %v1221 = vmul.f32 %v1161, 1.442695
      %v1222 = vpow.pop %v1221
      %v1223 = vmul.f32 %v1162, 1.442695
      %v1224 = vpow.pop %v1223
      %v1225 = vmul.f32 %v1163, 1.442695
      %v1226 = vpow.pop %v1225
      %v1227 = vmul.f32 %v1164, 1.442695
      %v1228 = vpow.pop %v1227
      %v1229 = vadd.f32 %v1166, 1.0
      %v1230 = vadd.f32 %v1168, 1.0
      %v1231 = vadd.f32 %v1170, 1.0
      %v1232 = vadd.f32 %v1172, 1.0
      %v1233 = vadd.f32 %v1174, 1.0
      %v1234 = vadd.f32 %v1176, 1.0
      %v1235 = vadd.f32 %v1178, 1.0
      %v1236 = vadd.f32 %v1180, 1.0
      %v1237 = vadd.f32 %v1182, 1.0
      %v1238 = vadd.f32 %v1184, 1.0
      %v1239 = vadd.f32 %v1186, 1.0
      %v1240 = vadd.f32 %v1188, 1.0
      %v1241 = vadd.f32 %v1190, 1.0
      %v1242 = vadd.f32 %v1192, 1.0
      %v1243 = vadd.f32 %v1194, 1.0
      %v1244 = vadd.f32 %v1196, 1.0
      %v1245 = vadd.f32 %v1198, 1.0
      %v1246 = vadd.f32 %v1200, 1.0
      %v1247 = vadd.f32 %v1202, 1.0
      %v1248 = vadd.f32 %v1204, 1.0
      %v1249 = vadd.f32 %v1206, 1.0
      %v1250 = vadd.f32 %v1208, 1.0
      %v1251 = vadd.f32 %v1210, 1.0
      %v1252 = vadd.f32 %v1212, 1.0
      %v1253 = vadd.f32 %v1214, 1.0
      %v1254 = vadd.f32 %v1216, 1.0
      %v1255 = vadd.f32 %v1218, 1.0
      %v1256 = vadd.f32 %v1220, 1.0
      %v1257 = vadd.f32 %v1222, 1.0
      %v1258 = vadd.f32 %v1224, 1.0
      %v1259 = vadd.f32 %v1226, 1.0
      %v1260 = vadd.f32 %v1228, 1.0
      %v1261 = vrcp.pop %v1229
      %v1262 = vrcp.pop %v1230
      %v1263 = vrcp.pop %v1231
      %v1264 = vrcp.pop %v1232
      %v1265 = vrcp.pop %v1233
      %v1266 = vrcp.pop %v1234
      %v1267 = vrcp.pop %v1235
      %v1268 = vrcp.pop %v1236
      %v1269 = vrcp.pop %v1237
      %v1270 = vrcp.pop %v1238
      %v1271 = vrcp.pop %v1239
      %v1272 = vrcp.pop %v1240
      %v1273 = vrcp.pop %v1241
      %v1274 = vrcp.pop %v1242
      %v1275 = vrcp.pop %v1243
      %v1276 = vrcp.pop %v1244
      %v1277 = vrcp.pop %v1245
      %v1278 = vrcp.pop %v1246
      %v1279 = vrcp.pop %v1247
      %v1280 = vrcp.pop %v1248
      %v1281 = vrcp.pop %v1249
      %v1282 = vrcp.pop %v1250
      %v1283 = vrcp.pop %v1251
      %v1284 = vrcp.pop %v1252
      %v1285 = vrcp.pop %v1253
      %v1286 = vrcp.pop %v1254
      %v1287 = vrcp.pop %v1255
      %v1288 = vrcp.pop %v1256
      %v1289 = vrcp.pop %v1257
      %v1290 = vrcp.pop %v1258
      %v1291 = vrcp.pop %v1259
      %v1292 = vrcp.pop %v1260
      %1294 = vset.pattern.permute.xlu0 0
      %1295 = vperm.xlu0 %1294, %v1261
      %v1296 = vpop.permute.xlu0 %1295
      %1299 = vset.pattern.permute.xlu0 0
      %1300 = vperm.xlu0 %1299, %v1262
      %v1301 = vpop.permute.xlu0 %1300
      %1304 = vset.pattern.permute.xlu0 0
      %1305 = vperm.xlu0 %1304, %v1263
      %v1306 = vpop.permute.xlu0 %1305
      %1309 = vset.pattern.permute.xlu0 0
      %1310 = vperm.xlu0 %1309, %v1264
      %v1311 = vpop.permute.xlu0 %1310
      %1314 = vset.pattern.permute.xlu0 0
      %1315 = vperm.xlu0 %1314, %v1265
      %v1316 = vpop.permute.xlu0 %1315
      %1319 = vset.pattern.permute.xlu0 0
      %1320 = vperm.xlu0 %1319, %v1266
      %v1321 = vpop.permute.xlu0 %1320
      %1324 = vset.pattern.permute.xlu0 0
      %1325 = vperm.xlu0 %1324, %v1267
      %v1326 = vpop.permute.xlu0 %1325
      %1329 = vset.pattern.permute.xlu0 0
      %1330 = vperm.xlu0 %1329, %v1268
      %v1331 = vpop.permute.xlu0 %1330
      %1334 = vset.pattern.permute.xlu0 0
      %1335 = vperm.xlu0 %1334, %v1269
      %v1336 = vpop.permute.xlu0 %1335
      %1339 = vset.pattern.permute.xlu0 0
      %1340 = vperm.xlu0 %1339, %v1270
      %v1341 = vpop.permute.xlu0 %1340
      %1344 = vset.pattern.permute.xlu0 0
      %1345 = vperm.xlu0 %1344, %v1271
      %v1346 = vpop.permute.xlu0 %1345
      %1349 = vset.pattern.permute.xlu0 0
      %1350 = vperm.xlu0 %1349, %v1272
      %v1351 = vpop.permute.xlu0 %1350
      %1354 = vset.pattern.permute.xlu0 0
      %1355 = vperm.xlu0 %1354, %v1273
      %v1356 = vpop.permute.xlu0 %1355
      %1359 = vset.pattern.permute.xlu0 0
      %1360 = vperm.xlu0 %1359, %v1274
      %v1361 = vpop.permute.xlu0 %1360
      %1364 = vset.pattern.permute.xlu0 0
      %1365 = vperm.xlu0 %1364, %v1275
      %v1366 = vpop.permute.xlu0 %1365
      %1369 = vset.pattern.permute.xlu0 0
      %1370 = vperm.xlu0 %1369, %v1276
      %v1371 = vpop.permute.xlu0 %1370
      %1374 = vset.pattern.permute.xlu0 0
      %1375 = vperm.xlu0 %1374, %v1277
      %v1376 = vpop.permute.xlu0 %1375
      %1379 = vset.pattern.permute.xlu0 0
      %1380 = vperm.xlu0 %1379, %v1278
      %v1381 = vpop.permute.xlu0 %1380
      %1384 = vset.pattern.permute.xlu0 0
      %1385 = vperm.xlu0 %1384, %v1279
      %v1386 = vpop.permute.xlu0 %1385
      %1389 = vset.pattern.permute.xlu0 0
      %1390 = vperm.xlu0 %1389, %v1280
      %v1391 = vpop.permute.xlu0 %1390
      %1394 = vset.pattern.permute.xlu0 0
      %1395 = vperm.xlu0 %1394, %v1281
      %v1396 = vpop.permute.xlu0 %1395
      %1399 = vset.pattern.permute.xlu0 0
      %1400 = vperm.xlu0 %1399, %v1282
      %v1401 = vpop.permute.xlu0 %1400
      %1404 = vset.pattern.permute.xlu0 0
      %1405 = vperm.xlu0 %1404, %v1283
      %v1406 = vpop.permute.xlu0 %1405
      %1409 = vset.pattern.permute.xlu0 0
      %1410 = vperm.xlu0 %1409, %v1284
      %v1411 = vpop.permute.xlu0 %1410
      %1414 = vset.pattern.permute.xlu0 0
      %1415 = vperm.xlu0 %1414, %v1285
      %v1416 = vpop.permute.xlu0 %1415
      %1419 = vset.pattern.permute.xlu0 0
      %1420 = vperm.xlu0 %1419, %v1286
      %v1421 = vpop.permute.xlu0 %1420
      %1424 = vset.pattern.permute.xlu0 0
      %1425 = vperm.xlu0 %1424, %v1287
      %v1426 = vpop.permute.xlu0 %1425
      %1429 = vset.pattern.permute.xlu0 0
      %1430 = vperm.xlu0 %1429, %v1288
      %v1431 = vpop.permute.xlu0 %1430
      %1434 = vset.pattern.permute.xlu0 0
      %1435 = vperm.xlu0 %1434, %v1289
      %v1436 = vpop.permute.xlu0 %1435
      %1439 = vset.pattern.permute.xlu0 0
      %1440 = vperm.xlu0 %1439, %v1290
      %v1441 = vpop.permute.xlu0 %1440
      %1444 = vset.pattern.permute.xlu0 0
      %1445 = vperm.xlu0 %1444, %v1291
      %v1446 = vpop.permute.xlu0 %1445
      %1449 = vset.pattern.permute.xlu0 0
      %1450 = vperm.xlu0 %1449, %v1292
      %v1451 = vpop.permute.xlu0 %1450
      %1453 = vst [vmem:[%s282] sm:$0xff] %v1296
      %1454 = vst [vmem:[%s282 + $0x8] sm:$0xff] %v1301
      %1455 = vst [vmem:[%s282 + $0x10] sm:$0xff] %v1306
      %1456 = vst [vmem:[%s282 + $0x18] sm:$0xff] %v1311
      %1457 = vst [vmem:[%s282 + $0x20] sm:$0xff] %v1316
      %1458 = vst [vmem:[%s282 + $0x28] sm:$0xff] %v1321
      %1459 = vst [vmem:[%s282 + $0x30] sm:$0xff] %v1326
      %1460 = vst [vmem:[%s282 + $0x38] sm:$0xff] %v1331
      %1461 = vst [vmem:[%s282 + $0x40] sm:$0xff] %v1336
      %1462 = vst [vmem:[%s282 + $0x48] sm:$0xff] %v1341
      %1463 = vst [vmem:[%s282 + $0x50] sm:$0xff] %v1346
      %1464 = vst [vmem:[%s282 + $0x58] sm:$0xff] %v1351
      %1465 = vst [vmem:[%s282 + $0x60] sm:$0xff] %v1356
      %1466 = vst [vmem:[%s282 + $0x68] sm:$0xff] %v1361
      %1467 = vst [vmem:[%s282 + $0x70] sm:$0xff] %v1366
      %1468 = vst [vmem:[%s282 + $0x78] sm:$0xff] %v1371
      %1469 = vst [vmem:[%s282 + $0x80] sm:$0xff] %v1376
      %1470 = vst [vmem:[%s282 + $0x88] sm:$0xff] %v1381
      %1471 = vst [vmem:[%s282 + $0x90] sm:$0xff] %v1386
      %1472 = vst [vmem:[%s282 + $0x98] sm:$0xff] %v1391
      %1473 = vst [vmem:[%s282 + $0xa0] sm:$0xff] %v1396
      %1474 = vst [vmem:[%s282 + $0xa8] sm:$0xff] %v1401
      %1475 = vst [vmem:[%s282 + $0xb0] sm:$0xff] %v1406
      %1476 = vst [vmem:[%s282 + $0xb8] sm:$0xff] %v1411
      %1477 = vst [vmem:[%s282 + $0xc0] sm:$0xff] %v1416
      %1478 = vst [vmem:[%s282 + $0xc8] sm:$0xff] %v1421
      %1479 = vst [vmem:[%s282 + $0xd0] sm:$0xff] %v1426
      %1480 = vst [vmem:[%s282 + $0xd8] sm:$0xff] %v1431
      %1481 = vst [vmem:[%s282 + $0xe0] sm:$0xff] %v1436
      %1482 = vst [vmem:[%s282 + $0xe8] sm:$0xff] %v1441
      %1483 = vst [vmem:[%s282 + $0xf0] sm:$0xff] %v1446
      %1484 = vst [vmem:[%s282 + $0xf8] sm:$0xff] %v1451
      %s1485 = smul.u32 32, %s20
      %p1486 = scmp.lt.s32.totalorder %s1485, 127
      %s1487 = scalar_select %p1486, %s1485, 127
      %s1488 = smul.addr %s1487, 8
      %s1489 = scalar_lea.vmem %s7, %s1488
      // Predicated region
      $region49: #{mlp_forward.1} parent=47 // pred_check
        %p1490 = pneg %p190
      $region50: #{mlp_forward.1} parent=47 // pred_check_branch
        %1492 = sbr.rel (%p1490) target = $region52
      $region51: #{mlp_forward.1} parent=47 // pred_region
        %s1493 = smul.u32 32, %s20
      $region52: #{mlp_forward.1} parent=47 // pred_fallthru
        _
    $region48: #{mlp_forward.1} parent=5 // pred_fallthru
      _
    %p1494 = scmp.le.s32.totalorder 2, %s15
    // Predicated region
    $region53: #{mlp_forward.1} parent=5 // pred_check
      %p1495 = pneg %p1494
    $region54: #{mlp_forward.1} parent=5 // pred_check_branch
      %1497 = sbr.rel (%p1495) target = $region56
    $region55: #{mlp_forward.1} parent=5 // pred_region
      %s1498 = ssub.s32 %s15, 2
      // Predicated region
      $region57: #{mlp_forward.1} parent=55 // pred_check
        %p1499 = pneg %p196
      $region58: #{mlp_forward.1} parent=55 // pred_check_branch
        %1501 = sbr.rel (%p1499) target = $region60
      $region59: #{mlp_forward.1} parent=55 // pred_region
        %s1502 = smul.u32 32, %s21
        %p1503 = scmp.lt.s32.totalorder %s1502, 127
        %s1504 = scalar_select %p1503, %s1502, 127
        %s1505 = smul.addr %s1504, 8
        %s1506 = scalar_lea.vmem %s7, %s1505
      $region60: #{mlp_forward.1} parent=55 // pred_fallthru
        _
    $region56: #{mlp_forward.1} parent=5 // pred_fallthru
      _
  $region6: #{mlp_forward.1} parent=0 // loop_footer
    %s19 = sadd.s32 1, %s15
  $region7: #{mlp_forward.1} parent=0 // loop_footer_branch
    %14 = sbr.rel target = $region3
  $region8: #{mlp_forward.1} parent=0 // loop_exit
    _

</llo_original>
